<compile_context>
chip_gen: v7x
topology: tpu7x:2x2x1
jax: 0.10.0
libtpu: 0.0.40
codegen_flags: <defaults>
</compile_context>

<pallas_src>
import functools

import jax
import jax.numpy as jnp
from jax.experimental import pallas as pl
from jax.experimental.pallas import tpu as pltpu


def _round_up(x, m):
    return ((x + m - 1) // m) * m


# ---------------------------------------------------------------------------
# Fused stacked-LSTM kernel: one grid step == one layer.
# ---------------------------------------------------------------------------
def _stacked_lstm_kernel(prev_ref, h0_ref, c0_ref, w_ref, b_ref,
                         out_ref, h1_ref, c1_ref, xh_ref, *, h_pad, p_in):
    l = pl.program_id(0)

    # Layer 0 input is `prev`; deeper layers reuse h_{l-1} already sitting in
    # xh_ref[:, :h_pad] (written at the end of the previous grid step).
    @pl.when(l == 0)
    def _():
        xh_ref[:, :p_in] = prev_ref[...]

    # Recurrent hidden state of this layer occupies the trailing h_pad columns.
    xh_ref[:, p_in:] = h0_ref[0]

    xh = xh_ref[...]                                        # (B, p_in + h_pad)
    cd = w_ref.dtype
    # Single fused matmul: gates = [x, h] @ [W_ih ; W_hh] + b, f32 accumulation.
    gates = jnp.dot(xh.astype(cd), w_ref[0],
                    preferred_element_type=jnp.float32) + b_ref[0]

    # PyTorch LSTMCell gate order (i, f, g, o); gate k lives at lane-aligned
    # columns [k*h_pad, (k+1)*h_pad) -> these slices are free views.
    i_g = jax.nn.sigmoid(gates[:, 0 * h_pad:1 * h_pad])
    f_g = jax.nn.sigmoid(gates[:, 1 * h_pad:2 * h_pad])
    g_g = jnp.tanh(gates[:, 2 * h_pad:3 * h_pad])
    o_g = jax.nn.sigmoid(gates[:, 3 * h_pad:4 * h_pad])

    c_new = f_g * c0_ref[0] + i_g * g_g                     # f32 cell update
    h_new = o_g * jnp.tanh(c_new)

    h1_ref[0] = h_new
    c1_ref[0] = c_new
    out_ref[...] = h_new          # output block is resident; last layer's write wins

    # Carry h_new as the next layer's input. Stale columns [h_pad:p_in] (if any)
    # only meet zero weight rows for layers > 0, so no explicit clearing needed.
    xh_ref[:, :h_pad] = h_new


# ---------------------------------------------------------------------------
# Forward wrapper (padding to lane-dense layout + single pallas_call)
# ---------------------------------------------------------------------------
def decoder_vae_forward(prev, hidden, params):
    """prev: (B, emb_dim); hidden = (h0, c0), each (num_layers, B, hid_dim)."""
    # TODO(synk): add_z=True / project_init=True / dropout>0 (training) paths are
    # not implemented; this config disables all of them (dropout=0 is identity).
    h0, c0 = hidden
    L = params["num_layers"]
    H = params["hid_dim"]
    E = params["emb_dim"]
    P_in = params["p_in"]
    H_pad = params["h_pad"]

    B = prev.shape[0]
    B_pad = _round_up(B, 8)

    # Zero-pad to the lane-dense compute layout (padded regions hit zero weight
    # rows / columns, so they contribute nothing and stay exactly zero).
    prev_p = jnp.pad(prev.astype(jnp.float32),
                     ((0, B_pad - B), (0, P_in - E)))
    h0_p = jnp.pad(h0.astype(jnp.float32),
                   ((0, 0), (0, B_pad - B), (0, H_pad - H)))
    c0_p = jnp.pad(c0.astype(jnp.float32),
                   ((0, 0), (0, B_pad - B), (0, H_pad - H)))

    kernel = functools.partial(_stacked_lstm_kernel, h_pad=H_pad, p_in=P_in)

    out_p, h1_p, c1_p = pl.pallas_call(
        kernel,
        out_shape=(
            jax.ShapeDtypeStruct((B_pad, H_pad), jnp.float32),
            jax.ShapeDtypeStruct((L, B_pad, H_pad), jnp.float32),
            jax.ShapeDtypeStruct((L, B_pad, H_pad), jnp.float32),
        ),
        grid=(L,),
        in_specs=[
            pl.BlockSpec((B_pad, P_in), lambda l: (0, 0)),                 # prev
            pl.BlockSpec((1, B_pad, H_pad), lambda l: (l, 0, 0)),          # h0[l]
            pl.BlockSpec((1, B_pad, H_pad), lambda l: (l, 0, 0)),          # c0[l]
            pl.BlockSpec((1, P_in + H_pad, 4 * H_pad), lambda l: (l, 0, 0)),  # W[l]
            pl.BlockSpec((1, 1, 4 * H_pad), lambda l: (l, 0, 0)),          # b[l]
        ],
        out_specs=(
            pl.BlockSpec((B_pad, H_pad), lambda l: (0, 0)),                # out
            pl.BlockSpec((1, B_pad, H_pad), lambda l: (l, 0, 0)),          # h1[l]
            pl.BlockSpec((1, B_pad, H_pad), lambda l: (l, 0, 0)),          # c1[l]
        ),
        scratch_shapes=[pltpu.VMEM((B_pad, P_in + H_pad), jnp.float32)],   # [x, h]
        compiler_params=pltpu.CompilerParams(
            # Layer l+1 depends on layer l (carried in scratch) -> sequential axis.
            dimension_semantics=("arbitrary",)),
    )(prev_p, h0_p, c0_p, params["w"], params["b"])

    out = out_p[:B, :H]
    h1 = h1_p[:, :B, :H]
    c1 = c1_p[:, :B, :H]
    return out, (h1, c1)


# ---------------------------------------------------------------------------
# Parameter construction: pack per-layer [W_ih ; W_hh] into a lane-dense,
# layer-stacked tensor at build time (no per-call repacking).
# ---------------------------------------------------------------------------
def _pack_gate_cols(w_t, hid_dim, h_pad):
    """(rows, 4*H) -> (rows, 4*h_pad), gate k placed at columns k*h_pad."""
    rows = w_t.shape[0]
    w3 = w_t.reshape(rows, 4, hid_dim)
    w3 = jnp.pad(w3, ((0, 0), (0, 0), (0, h_pad - hid_dim)))
    return w3.reshape(rows, 4 * h_pad)


def make_params(key, num_layers, emb_dim, hid_dim, matmul_dtype=jnp.float32):
    """Returns (packed_params_for_kernel, raw_pytorch_style_params_for_reference)."""
    H = hid_dim
    H_pad = _round_up(H, 128)
    P_in = max(_round_up(emb_dim, 128), H_pad)
    scale = 1.0 / (hid_dim ** 0.5)

    raw, w_blocks, b_blocks = [], [], []
    for l in range(num_layers):
        in_dim = emb_dim if l == 0 else hid_dim
        key, k1, k2, k3, k4 = jax.random.split(key, 5)
        w_ih = jax.random.uniform(k1, (4 * H, in_dim), jnp.float32, -scale, scale)
        w_hh = jax.random.uniform(k2, (4 * H, H), jnp.float32, -scale, scale)
        b_ih = jax.random.uniform(k3, (4 * H,), jnp.float32, -scale, scale)
        b_hh = jax.random.uniform(k4, (4 * H,), jnp.float32, -scale, scale)
        raw.append((w_ih, w_hh, b_ih, b_hh))

        # Concatenated, gate-padded weight: rows [0:in_dim] = W_ih^T,
        # rows [P_in:P_in+H] = W_hh^T, everything else zero.
        w_cat = jnp.zeros((P_in + H_pad, 4 * H_pad), jnp.float32)
        w_cat = w_cat.at[:in_dim, :].set(_pack_gate_cols(w_ih.T, H, H_pad))
        w_cat = w_cat.at[P_in:P_in + H, :].set(_pack_gate_cols(w_hh.T, H, H_pad))
        w_blocks.append(w_cat.astype(matmul_dtype))

        b_blocks.append(_pack_gate_cols((b_ih + b_hh).reshape(1, 4 * H), H, H_pad))

    packed = {
        "w": jnp.stack(w_blocks),                      # (L, P_in+H_pad, 4*H_pad)
        "b": jnp.stack(b_blocks),                      # (L, 1, 4*H_pad), float32
        "emb_dim": emb_dim, "hid_dim": hid_dim,
        "p_in": P_in, "h_pad": H_pad, "num_layers": num_layers,
    }
    return packed, raw


# ---------------------------------------------------------------------------
# Pure-JAX reference (same math as torch StackedLSTM of nn.LSTMCell)
# ---------------------------------------------------------------------------
def decoder_vae_reference(prev, hidden, raw_params):
    h0, c0 = hidden
    inp = prev
    hs, cs = [], []
    for l, (w_ih, w_hh, b_ih, b_hh) in enumerate(raw_params):
        gates = inp @ w_ih.T + h0[l] @ w_hh.T + b_ih + b_hh
        i, f, g, o = jnp.split(gates, 4, axis=-1)
        c = jax.nn.sigmoid(f) * c0[l] + jax.nn.sigmoid(i) * jnp.tanh(g)
        h = jax.nn.sigmoid(o) * jnp.tanh(c)
        hs.append(h)
        cs.append(c)
        inp = h
    return inp, (jnp.stack(hs), jnp.stack(cs))


# ---------------------------------------------------------------------------
# Example run
# ---------------------------------------------------------------------------
if __name__ == "__main__":
    # Module config: cell='LSTM', add_z=False, project_init=False, dropout=0.0
    # -> z_dim must equal num_layers * hid_dim.
    batch, emb_dim, hid_dim, num_layers = 8, 32, 32, 2
    z_dim = num_layers * hid_dim

    key = jax.random.PRNGKey(0)
    k_prev, k_z, k_c0, k_par = jax.random.split(key, 4)

    prev = jax.random.normal(k_prev, (batch, emb_dim), jnp.float32)
    z = jax.random.normal(k_z, (batch, z_dim), jnp.float32)

    # init_hidden_for(z): h0 = z.view(num_layers, batch, hid_dim); c0 ~ xavier-ish
    h0 = z.reshape(num_layers, batch, hid_dim)
    c0 = jax.random.normal(k_c0, (num_layers, batch, hid_dim), jnp.float32) * 0.1

    # matmul_dtype=jnp.bfloat16 halves weight DMA/VMEM and doubles MXU rate on
    # v6e/v7x; f32 is used here for exact parity with the PyTorch reference.
    params, raw = make_params(k_par, num_layers, emb_dim, hid_dim,
                              matmul_dtype=jnp.float32)

    @jax.jit
    def fwd(prev, hidden):
        return decoder_vae_forward(prev, hidden, params)

    out, (h1, c1) = fwd(prev, (h0, c0))
    jax.block_until_ready((out, h1, c1))

    ref_out, (ref_h1, ref_c1) = decoder_vae_reference(prev, (h0, c0), raw)

    assert out.shape == (batch, hid_dim)
    assert h1.shape == (num_layers, batch, hid_dim)
    assert c1.shape == (num_layers, batch, hid_dim)
    assert jnp.allclose(out, ref_out, atol=1e-4, rtol=1e-4)
    assert jnp.allclose(h1, ref_h1, atol=1e-4, rtol=1e-4)
    assert jnp.allclose(c1, ref_c1, atol=1e-4, rtol=1e-4)
    print("KERNEL_OK")
</pallas_src>

<mosaic_0001>
module attributes {stable_mosaic.version = 11 : i64} {
  func.func @_stacked_lstm_kernel(%arg0: i32, %arg1: memref<8x128xf32, #tpu.memory_space<vmem>>, %arg2: memref<1x8x128xf32, #tpu.memory_space<vmem>>, %arg3: memref<1x8x128xf32, #tpu.memory_space<vmem>>, %arg4: memref<1x256x512xf32, #tpu.memory_space<vmem>>, %arg5: memref<1x1x512xf32, #tpu.memory_space<vmem>>, %arg6: memref<8x128xf32, #tpu.memory_space<vmem>>, %arg7: memref<1x8x128xf32, #tpu.memory_space<vmem>>, %arg8: memref<1x8x128xf32, #tpu.memory_space<vmem>>, %arg9: memref<8x256xf32, #tpu.memory_space<vmem>>) attributes {dimension_semantics = [#tpu.dimension_semantics<arbitrary>], iteration_bounds = array<i64: 2>, scalar_prefetch = 0 : i64, scratch_operands = 1 : i64, tpu.core_type = #tpu.core_type<tc>, window_params = [{pipeline_mode = #tpu.pipeline_mode<synchronous>, transform_indices = @transform_0, window_bounds = array<i64: 8, 128>}, {transform_indices = @transform_1, window_bounds = array<i64: 1, 8, 128>}, {transform_indices = @transform_2, window_bounds = array<i64: 1, 8, 128>}, {transform_indices = @transform_3, window_bounds = array<i64: 1, 256, 512>}, {transform_indices = @transform_4, window_bounds = array<i64: 1, 1, 512>}, {pipeline_mode = #tpu.pipeline_mode<synchronous>, transform_indices = @transform_5, window_bounds = array<i64: 8, 128>}, {transform_indices = @transform_6, window_bounds = array<i64: 1, 8, 128>}, {transform_indices = @transform_7, window_bounds = array<i64: 1, 8, 128>}]} {
    %c0_i32 = arith.constant 0 : i32
    %0 = arith.cmpi eq, %arg0, %c0_i32 : i32
    %1 = arith.extui %0 : i1 to i32
    %c0_i32_0 = arith.constant 0 : i32
    %2 = arith.cmpi ne, %1, %c0_i32_0 : i32
    scf.if %2 {
      %c0_28 = arith.constant 0 : index
      %c0_29 = arith.constant 0 : index
      %49 = vector.load %arg1[%c0_28, %c0_29] : memref<8x128xf32, #tpu.memory_space<vmem>>, vector<8x128xf32>
      %c0_30 = arith.constant 0 : index
      %c0_31 = arith.constant 0 : index
      %50 = vector.load %arg9[%c0_30, %c0_31] : memref<8x256xf32, #tpu.memory_space<vmem>>, vector<8x128xf32>
      tpu.vector_store %arg9[%c0_30, %c0_31], %49 {strides = array<i32>} : memref<8x256xf32, #tpu.memory_space<vmem>>, vector<8x128xf32>,
    } else {
    }
    %c0 = arith.constant 0 : index
    %c0_1 = arith.constant 0 : index
    %c0_2 = arith.constant 0 : index
    %3 = vector.load %arg2[%c0, %c0_1, %c0_2] : memref<1x8x128xf32, #tpu.memory_space<vmem>>, vector<1x8x128xf32>
    %4 = vector.shape_cast %3 : vector<1x8x128xf32> to vector<8x128xf32>
    %c0_3 = arith.constant 0 : index
    %c128 = arith.constant 128 : index
    %5 = vector.load %arg9[%c0_3, %c128] : memref<8x256xf32, #tpu.memory_space<vmem>>, vector<8x128xf32>
    tpu.vector_store %arg9[%c0_3, %c128], %4 {strides = array<i32>} : memref<8x256xf32, #tpu.memory_space<vmem>>, vector<8x128xf32>,
    %c0_4 = arith.constant 0 : index
    %c0_5 = arith.constant 0 : index
    %6 = vector.load %arg9[%c0_4, %c0_5] : memref<8x256xf32, #tpu.memory_space<vmem>>, vector<8x256xf32>
    %c0_6 = arith.constant 0 : index
    %c0_7 = arith.constant 0 : index
    %c0_8 = arith.constant 0 : index
    %7 = vector.load %arg4[%c0_6, %c0_7, %c0_8] : memref<1x256x512xf32, #tpu.memory_space<vmem>>, vector<1x256x512xf32>
    %8 = vector.shape_cast %7 : vector<1x256x512xf32> to vector<256x512xf32>
    %cst = arith.constant dense<0.000000e+00> : vector<8x512xf32>
    %9 = tpu.matmul %6, %8, %cst {dimension_numbers = #tpu.dot_dimension_numbers<[1], [0], [0], [1], [0, 0, 1, 1], [], []>} : vector<8x256xf32>, vector<256x512xf32>, vector<8x512xf32> -> vector<8x512xf32>
    %c0_9 = arith.constant 0 : index
    %c0_10 = arith.constant 0 : index
    %c0_11 = arith.constant 0 : index
    %10 = vector.load %arg5[%c0_9, %c0_10, %c0_11] : memref<1x1x512xf32, #tpu.memory_space<vmem>>, vector<1x1x512xf32>
    %11 = vector.shape_cast %10 : vector<1x1x512xf32> to vector<1x512xf32>
    %12 = vector.broadcast %11 : vector<1x512xf32> to vector<8x512xf32>
    %13 = arith.addf %9, %12 : vector<8x512xf32>
    %14 = vector.extract_strided_slice %13 {offsets = [0, 0], sizes = [8, 128], strides = [1, 1]} : vector<8x512xf32> to vector<8x128xf32>
    %15 = arith.negf %14 : vector<8x128xf32>
    %16 = math.exp %15 : vector<8x128xf32>
    %cst_12 = arith.constant 1.000000e+00 : f32
    %17 = vector.broadcast %cst_12 : f32 to vector<8x128xf32>
    %18 = arith.addf %17, %16 : vector<8x128xf32>
    %19 = arith.divf %17, %18 : vector<8x128xf32>
    %20 = vector.extract_strided_slice %13 {offsets = [0, 128], sizes = [8, 128], strides = [1, 1]} : vector<8x512xf32> to vector<8x128xf32>
    %21 = arith.negf %20 : vector<8x128xf32>
    %22 = math.exp %21 : vector<8x128xf32>
    %cst_13 = arith.constant 1.000000e+00 : f32
    %23 = vector.broadcast %cst_13 : f32 to vector<8x128xf32>
    %24 = arith.addf %23, %22 : vector<8x128xf32>
    %25 = arith.divf %23, %24 : vector<8x128xf32>
    %26 = vector.extract_strided_slice %13 {offsets = [0, 256], sizes = [8, 128], strides = [1, 1]} : vector<8x512xf32> to vector<8x128xf32>
    %27 = math.tanh %26 : vector<8x128xf32>
    %28 = vector.extract_strided_slice %13 {offsets = [0, 384], sizes = [8, 128], strides = [1, 1]} : vector<8x512xf32> to vector<8x128xf32>
    %29 = arith.negf %28 : vector<8x128xf32>
    %30 = math.exp %29 : vector<8x128xf32>
    %cst_14 = arith.constant 1.000000e+00 : f32
    %31 = vector.broadcast %cst_14 : f32 to vector<8x128xf32>
    %32 = arith.addf %31, %30 : vector<8x128xf32>
    %33 = arith.divf %31, %32 : vector<8x128xf32>
    %c0_15 = arith.constant 0 : index
    %c0_16 = arith.constant 0 : index
    %c0_17 = arith.constant 0 : index
    %34 = vector.load %arg3[%c0_15, %c0_16, %c0_17] : memref<1x8x128xf32, #tpu.memory_space<vmem>>, vector<1x8x128xf32>
    %35 = vector.shape_cast %34 : vector<1x8x128xf32> to vector<8x128xf32>
    %36 = arith.mulf %25, %35 : vector<8x128xf32>
    %37 = arith.mulf %19, %27 : vector<8x128xf32>
    %38 = arith.addf %36, %37 : vector<8x128xf32>
    %39 = math.tanh %38 : vector<8x128xf32>
    %40 = arith.mulf %33, %39 : vector<8x128xf32>
    %c0_18 = arith.constant 0 : index
    %c0_19 = arith.constant 0 : index
    %c0_20 = arith.constant 0 : index
    %41 = vector.load %arg7[%c0_18, %c0_19, %c0_20] : memref<1x8x128xf32, #tpu.memory_space<vmem>>, vector<1x8x128xf32>
    %42 = vector.shape_cast %41 : vector<1x8x128xf32> to vector<8x128xf32>
    %43 = vector.shape_cast %40 : vector<8x128xf32> to vector<1x8x128xf32>
    tpu.vector_store %arg7[%c0_18, %c0_19, %c0_20], %43 {strides = array<i32>} : memref<1x8x128xf32, #tpu.memory_space<vmem>>, vector<1x8x128xf32>,
    %c0_21 = arith.constant 0 : index
    %c0_22 = arith.constant 0 : index
    %c0_23 = arith.constant 0 : index
    %44 = vector.load %arg8[%c0_21, %c0_22, %c0_23] : memref<1x8x128xf32, #tpu.memory_space<vmem>>, vector<1x8x128xf32>
    %45 = vector.shape_cast %44 : vector<1x8x128xf32> to vector<8x128xf32>
    %46 = vector.shape_cast %38 : vector<8x128xf32> to vector<1x8x128xf32>
    tpu.vector_store %arg8[%c0_21, %c0_22, %c0_23], %46 {strides = array<i32>} : memref<1x8x128xf32, #tpu.memory_space<vmem>>, vector<1x8x128xf32>,
    %c0_24 = arith.constant 0 : index
    %c0_25 = arith.constant 0 : index
    %47 = vector.load %arg6[%c0_24, %c0_25] : memref<8x128xf32, #tpu.memory_space<vmem>>, vector<8x128xf32>
    tpu.vector_store %arg6[%c0_24, %c0_25], %40 {strides = array<i32>} : memref<8x128xf32, #tpu.memory_space<vmem>>, vector<8x128xf32>,
    %c0_26 = arith.constant 0 : index
    %c0_27 = arith.constant 0 : index
    %48 = vector.load %arg9[%c0_26, %c0_27] : memref<8x256xf32, #tpu.memory_space<vmem>>, vector<8x128xf32>
    tpu.vector_store %arg9[%c0_26, %c0_27], %40 {strides = array<i32>} : memref<8x256xf32, #tpu.memory_space<vmem>>, vector<8x128xf32>,
    return
  }
  func.func @transform_0(%arg0: i32) -> (i32, i32) {
    %c0_i32 = arith.constant 0 : i32
    %c0_i32_0 = arith.constant 0 : i32
    %c0_i32_1 = arith.constant 0 : i32
    return %c0_i32, %c0_i32_0 : i32, i32
  }
  func.func @transform_1(%arg0: i32) -> (i32, i32, i32) {
    %c0_i32 = arith.constant 0 : i32
    %c0_i32_0 = arith.constant 0 : i32
    %c0_i32_1 = arith.constant 0 : i32
    return %arg0, %c0_i32, %c0_i32_0 : i32, i32, i32
  }
  func.func @transform_2(%arg0: i32) -> (i32, i32, i32) {
    %c0_i32 = arith.constant 0 : i32
    %c0_i32_0 = arith.constant 0 : i32
    %c0_i32_1 = arith.constant 0 : i32
    return %arg0, %c0_i32, %c0_i32_0 : i32, i32, i32
  }
  func.func @transform_3(%arg0: i32) -> (i32, i32, i32) {
    %c0_i32 = arith.constant 0 : i32
    %c0_i32_0 = arith.constant 0 : i32
    %c0_i32_1 = arith.constant 0 : i32
    return %arg0, %c0_i32, %c0_i32_0 : i32, i32, i32
  }
  func.func @transform_4(%arg0: i32) -> (i32, i32, i32) {
    %c0_i32 = arith.constant 0 : i32
    %c0_i32_0 = arith.constant 0 : i32
    %c0_i32_1 = arith.constant 0 : i32
    return %arg0, %c0_i32, %c0_i32_0 : i32, i32, i32
  }
  func.func @transform_5(%arg0: i32) -> (i32, i32) {
    %c0_i32 = arith.constant 0 : i32
    %c0_i32_0 = arith.constant 0 : i32
    %c0_i32_1 = arith.constant 0 : i32
    return %c0_i32, %c0_i32_0 : i32, i32
  }
  func.func @transform_6(%arg0: i32) -> (i32, i32, i32) {
    %c0_i32 = arith.constant 0 : i32
    %c0_i32_0 = arith.constant 0 : i32
    %c0_i32_1 = arith.constant 0 : i32
    return %arg0, %c0_i32, %c0_i32_0 : i32, i32, i32
  }
  func.func @transform_7(%arg0: i32) -> (i32, i32, i32) {
    %c0_i32 = arith.constant 0 : i32
    %c0_i32_0 = arith.constant 0 : i32
    %c0_i32_1 = arith.constant 0 : i32
    return %arg0, %c0_i32, %c0_i32_0 : i32, i32, i32
  }
}

</mosaic_0001>

<llo_original>
// kernel: fwd.1
$region0: #{fwd.1}
  #allocation0 [shape = 'u32[]', space=smem, size = 0x4, offset = 0x4, fixed_abs, tag = 'smem constant byte address 0x4 - core index']
  #allocation1 [shape = 'u32[144,128]{1,0:T(1,128)}', space=vmem, size = 0x12000, scoped, tag = 'internal scratch']
  #allocation2 [shape = 'f32[8,256]{1,0:T(8,128)}', space=vmem, size = 0x2000, scoped, tag = 'scratch operand']
  %s0 = inlined_call_operand.vmem [shape: f32[8,128], index: 0, kind: input, shape index: {}]
  %s1 = inlined_call_operand.vmem [shape: f32[2,8,128], index: 1, kind: input, shape index: {}]
  %s2 = inlined_call_operand.vmem [shape: f32[2,8,128], index: 2, kind: input, shape index: {}]
  %s3 = inlined_call_operand.hbm [shape: f32[2,256,512], index: 3, kind: input, shape index: {}]
  %s4 = inlined_call_operand.vmem [shape: f32[2,1,512], index: 4, kind: input, shape index: {}]
  %s5 = inlined_call_operand.hbm [shape: f32[8,128], index: 5, kind: output, shape index: {0}]
  %s6 = inlined_call_operand.hbm [shape: f32[2,8,128], index: 6, kind: output, shape index: {1}]
  %s7 = inlined_call_operand.hbm [shape: f32[2,8,128], index: 7, kind: output, shape index: {2}]
  %8 = xla_tuple %s5, %s6, %s7
  %s9 = sld [smem:[#allocation0]]
  $region77: #{fwd.1} parent=0
    _
  %s11 = ssub.s32 1, %s9
  %s12 = scalar_select 0, %s11, %s9
  $region1: #{fwd.1} parent=0
    #allocation3 [shape = 'u8[1048576]{0}', space=vmem, size = 0x100000, scoped, tag = 'input window, operand 3']
    #allocation4 [shape = 's32[2]{0}', space=sflag, size = 0x8, scoped, tag = 'scoped memory for fwd.1']
    #allocation5 [shape = 's32[2]{0}', space=sflag, size = 0x8, scoped, tag = 'scoped memory for fwd.1']
    #allocation6 [shape = 'u8[4096]{0}', space=vmem, size = 0x1000, scoped, tag = 'output window, operand 0, single buffered']
    #allocation7 [shape = 'u8[8192]{0}', space=vmem, size = 0x2000, scoped, tag = 'output window, operand 1']
    #allocation8 [shape = 's32[2]{0}', space=sflag, size = 0x8, scoped, tag = 'scoped memory for fwd.1']
    #allocation9 [shape = 'u8[8192]{0}', space=vmem, size = 0x2000, scoped, tag = 'output window, operand 2']
    %13 = vsyncpa [#allocation4], 0
    %s14 = scalar_lea.sflag [#allocation4], 1
    %15 = vsyncpa %s14, 0
    %16 = vsyncpa [#allocation5], 0
    %17 = vsyncpa [#allocation8], 0
    %s18 = scalar_lea.sflag [#allocation8], 1
    %19 = vsyncpa %s18, 0
    loop: start=0, step=1, limit=4
    $region2: #{fwd.1} parent=1 // loop_pre_header
      _
    $region3: #{fwd.1} parent=1 // loop_header
      %s21 = sphi 0, %s25
      %p22 = scmp.ge.s32.totalorder %s21, 4
      %s29 = sphi 0, %s29
      %s31 = sphi 0, %s29
      %s32 = sphi 0, %s31
      %s46 = sphi 0, %s32
      %s52 = sphi 0, %s54
      %s55 = sphi 0, %s52
      %s56 = sphi 0, %s55
      %s72 = sphi 0, %s56
      %s78 = sphi 0, %s80
      %s81 = sphi 0, %s78
      %s82 = sphi 0, %s81
      %s98 = sphi 0, %s82
      %s104 = sphi 0, %s106
      %s107 = sphi 0, %s104
      %s108 = sphi 0, %s107
      %s124 = sphi 0, %s108
      %s130 = sphi 0, %s132
      %s133 = sphi 0, %s130
      %s134 = sphi 0, %s133
      %s150 = sphi 0, %s134
      %s154 = sphi 0, %s154
      %s156 = sphi 0, %s154
      %s157 = sphi 0, %s156
      %s171 = sphi 0, %s157
      %s177 = sphi 0, %s179
      %s180 = sphi 0, %s177
      %s181 = sphi 0, %s180
      %s197 = sphi 0, %s181
      %s203 = sphi 0, %s205
      %s206 = sphi 0, %s203
      %s207 = sphi 0, %s206
      %s223 = sphi 0, %s207
    $region4: #{fwd.1} parent=1 // loop_header_branch
      %24 = sbr.rel (%p22) target = $region8
    $region5: #{fwd.1} parent=1 // loop_body
      %s26 = ssub.s32 %s21, 1
      %s27 = ssub.s32 %s21, 2
      %s28 = sadd.s32 %s21, 1
      %s30 = sadd.s32 %s29, 1
      %p33 = scmp.eq.s32.totalorder %s21, 1
      %p34 = scmp.ne.s32.totalorder %s29, %s31
      %p35 = scmp.eq.s32.totalorder %s21, 0
      %p36 = por %p34, %p35
      %p37 = scmp.ne.s32.totalorder %s29, %s31
      %p38 = scmp.eq.s32.totalorder %s26, 1
      %p39 = por %p37, %p38
      %p40 = scmp.ne.s32.totalorder %s31, %s32
      %p41 = scmp.eq.s32.totalorder %s26, 0
      %p42 = por %p40, %p41
      %p43 = scmp.ne.s32.totalorder %s31, %s32
      %p44 = scmp.eq.s32.totalorder %s27, 1
      %p45 = por %p43, %p44
      %p47 = scmp.ne.s32.totalorder %s32, %s46
      %p48 = scmp.eq.s32.totalorder %s27, 0
      %p49 = por %p47, %p48
      %s50 = ssub.s32 %s21, %s28
      %p51 = scmp.eq.s32.totalorder %s50, 0
      %s53 = sadd.s32 %s52, 1
      %s54 = scalar_select %p51, %s52, %s53
      %p57 = pneg %p51
      %p58 = scmp.eq.s32.totalorder %s21, 1
      %p59 = por %p57, %p58
      %p60 = scmp.ne.s32.totalorder %s52, %s55
      %p61 = scmp.eq.s32.totalorder %s21, 0
      %p62 = por %p60, %p61
      %p63 = scmp.ne.s32.totalorder %s52, %s55
      %p64 = scmp.eq.s32.totalorder %s26, 1
      %p65 = por %p63, %p64
      %p66 = scmp.ne.s32.totalorder %s55, %s56
      %p67 = scmp.eq.s32.totalorder %s26, 0
      %p68 = por %p66, %p67
      %p69 = scmp.ne.s32.totalorder %s55, %s56
      %p70 = scmp.eq.s32.totalorder %s27, 1
      %p71 = por %p69, %p70
      %p73 = scmp.ne.s32.totalorder %s56, %s72
      %p74 = scmp.eq.s32.totalorder %s27, 0
      %p75 = por %p73, %p74
      %s76 = ssub.s32 %s21, %s28
      %p77 = scmp.eq.s32.totalorder %s76, 0
      %s79 = sadd.s32 %s78, 1
      %s80 = scalar_select %p77, %s78, %s79
      %p83 = pneg %p77
      %p84 = scmp.eq.s32.totalorder %s21, 1
      %p85 = por %p83, %p84
      %p86 = scmp.ne.s32.totalorder %s78, %s81
      %p87 = scmp.eq.s32.totalorder %s21, 0
      %p88 = por %p86, %p87
      %p89 = scmp.ne.s32.totalorder %s78, %s81
      %p90 = scmp.eq.s32.totalorder %s26, 1
      %p91 = por %p89, %p90
      %p92 = scmp.ne.s32.totalorder %s81, %s82
      %p93 = scmp.eq.s32.totalorder %s26, 0
      %p94 = por %p92, %p93
      %p95 = scmp.ne.s32.totalorder %s81, %s82
      %p96 = scmp.eq.s32.totalorder %s27, 1
      %p97 = por %p95, %p96
      %p99 = scmp.ne.s32.totalorder %s82, %s98
      %p100 = scmp.eq.s32.totalorder %s27, 0
      %p101 = por %p99, %p100
      %s102 = ssub.s32 %s21, %s28
      %p103 = scmp.eq.s32.totalorder %s102, 0
      %s105 = sadd.s32 %s104, 1
      %s106 = scalar_select %p103, %s104, %s105
      %p109 = pneg %p103
      %p110 = scmp.eq.s32.totalorder %s21, 1
      %p111 = por %p109, %p110
      %p112 = scmp.ne.s32.totalorder %s104, %s107
      %p113 = scmp.eq.s32.totalorder %s21, 0
      %p114 = por %p112, %p113
      %p115 = scmp.ne.s32.totalorder %s104, %s107
      %p116 = scmp.eq.s32.totalorder %s26, 1
      %p117 = por %p115, %p116
      %p118 = scmp.ne.s32.totalorder %s107, %s108
      %p119 = scmp.eq.s32.totalorder %s26, 0
      %p120 = por %p118, %p119
      %p121 = scmp.ne.s32.totalorder %s107, %s108
      %p122 = scmp.eq.s32.totalorder %s27, 1
      %p123 = por %p121, %p122
      %p125 = scmp.ne.s32.totalorder %s108, %s124
      %p126 = scmp.eq.s32.totalorder %s27, 0
      %p127 = por %p125, %p126
      %s128 = ssub.s32 %s21, %s28
      %p129 = scmp.eq.s32.totalorder %s128, 0
      %s131 = sadd.s32 %s130, 1
      %s132 = scalar_select %p129, %s130, %s131
      %p135 = pneg %p129
      %p136 = scmp.eq.s32.totalorder %s21, 1
      %p137 = por %p135, %p136
      %p138 = scmp.ne.s32.totalorder %s130, %s133
      %p139 = scmp.eq.s32.totalorder %s21, 0
      %p140 = por %p138, %p139
      %p141 = scmp.ne.s32.totalorder %s130, %s133
      %p142 = scmp.eq.s32.totalorder %s26, 1
      %p143 = por %p141, %p142
      %p144 = scmp.ne.s32.totalorder %s133, %s134
      %p145 = scmp.eq.s32.totalorder %s26, 0
      %p146 = por %p144, %p145
      %p147 = scmp.ne.s32.totalorder %s133, %s134
      %p148 = scmp.eq.s32.totalorder %s27, 1
      %p149 = por %p147, %p148
      %p151 = scmp.ne.s32.totalorder %s134, %s150
      %p152 = scmp.eq.s32.totalorder %s27, 0
      %p153 = por %p151, %p152
      %s155 = sadd.s32 %s154, 1
      %p158 = scmp.eq.s32.totalorder %s21, 1
      %p159 = scmp.ne.s32.totalorder %s154, %s156
      %p160 = scmp.eq.s32.totalorder %s21, 0
      %p161 = por %p159, %p160
      %p162 = scmp.ne.s32.totalorder %s154, %s156
      %p163 = scmp.eq.s32.totalorder %s26, 1
      %p164 = por %p162, %p163
      %p165 = scmp.ne.s32.totalorder %s156, %s157
      %p166 = scmp.eq.s32.totalorder %s26, 0
      %p167 = por %p165, %p166
      %p168 = scmp.ne.s32.totalorder %s156, %s157
      %p169 = scmp.eq.s32.totalorder %s27, 1
      %p170 = por %p168, %p169
      %p172 = scmp.ne.s32.totalorder %s157, %s171
      %p173 = scmp.eq.s32.totalorder %s27, 0
      %p174 = por %p172, %p173
      %s175 = ssub.s32 %s21, %s28
      %p176 = scmp.eq.s32.totalorder %s175, 0
      %s178 = sadd.s32 %s177, 1
      %s179 = scalar_select %p176, %s177, %s178
      %p182 = pneg %p176
      %p183 = scmp.eq.s32.totalorder %s21, 1
      %p184 = por %p182, %p183
      %p185 = scmp.ne.s32.totalorder %s177, %s180
      %p186 = scmp.eq.s32.totalorder %s21, 0
      %p187 = por %p185, %p186
      %p188 = scmp.ne.s32.totalorder %s177, %s180
      %p189 = scmp.eq.s32.totalorder %s26, 1
      %p190 = por %p188, %p189
      %p191 = scmp.ne.s32.totalorder %s180, %s181
      %p192 = scmp.eq.s32.totalorder %s26, 0
      %p193 = por %p191, %p192
      %p194 = scmp.ne.s32.totalorder %s180, %s181
      %p195 = scmp.eq.s32.totalorder %s27, 1
      %p196 = por %p194, %p195
      %p198 = scmp.ne.s32.totalorder %s181, %s197
      %p199 = scmp.eq.s32.totalorder %s27, 0
      %p200 = por %p198, %p199
      %s201 = ssub.s32 %s21, %s28
      %p202 = scmp.eq.s32.totalorder %s201, 0
      %s204 = sadd.s32 %s203, 1
      %s205 = scalar_select %p202, %s203, %s204
      %p208 = pneg %p202
      %p209 = scmp.eq.s32.totalorder %s21, 1
      %p210 = por %p208, %p209
      %p211 = scmp.ne.s32.totalorder %s203, %s206
      %p212 = scmp.eq.s32.totalorder %s21, 0
      %p213 = por %p211, %p212
      %p214 = scmp.ne.s32.totalorder %s203, %s206
      %p215 = scmp.eq.s32.totalorder %s26, 1
      %p216 = por %p214, %p215
      %p217 = scmp.ne.s32.totalorder %s206, %s207
      %p218 = scmp.eq.s32.totalorder %s26, 0
      %p219 = por %p217, %p218
      %p220 = scmp.ne.s32.totalorder %s206, %s207
      %p221 = scmp.eq.s32.totalorder %s27, 1
      %p222 = por %p220, %p221
      %p224 = scmp.ne.s32.totalorder %s207, %s223
      %p225 = scmp.eq.s32.totalorder %s27, 0
      %p226 = por %p224, %p225
      %p227 = scmp.le.s32.totalorder 1, %s21
      %p228 = scmp.lt.s32.totalorder %s21, 3
      %p229 = pnand %p227, %p228
      %p230 = pneg %p229
      // Predicated region
      $region9: #{fwd.1} parent=5 // pred_check
        _
      $region10: #{fwd.1} parent=5 // pred_check_branch
        %232 = sbr.rel (%p229) target = $region12
      $region11: #{fwd.1} parent=5 // pred_region
        %s233 = ssub.s32 %s21, 1
        // Predicated region
        $region13: #{fwd.1} parent=11 // pred_check
          %p234 = pneg %p42
        $region14: #{fwd.1} parent=11 // pred_check_branch
          %236 = sbr.rel (%p234) target = $region16
        $region15: #{fwd.1} parent=11 // pred_region
          _
        $region16: #{fwd.1} parent=11 // pred_fallthru
          _
      $region12: #{fwd.1} parent=5 // pred_fallthru
        _
      %p237 = scmp.lt.s32.totalorder %s21, 2
      // Predicated region
      $region17: #{fwd.1} parent=5 // pred_check
        %p238 = pneg %p237
      $region18: #{fwd.1} parent=5 // pred_check_branch
        %240 = sbr.rel (%p238) target = $region20
      $region19: #{fwd.1} parent=5 // pred_region
        // Predicated region
        $region21: #{fwd.1} parent=19 // pred_check
          %p241 = pneg %p62
        $region22: #{fwd.1} parent=19 // pred_check_branch
          %243 = sbr.rel (%p241) target = $region24
        $region23: #{fwd.1} parent=19 // pred_region
          %p244 = scmp.lt.s32.totalorder %s21, 1
          %s245 = scalar_select %p244, %s21, 1
          %s246 = smul.addr %s245, 8
          %s247 = scalar_lea.vmem %s1, %s246
        $region24: #{fwd.1} parent=19 // pred_fallthru
          _
        // Predicated region
        $region25: #{fwd.1} parent=19 // pred_check
          %p248 = pneg %p88
        $region26: #{fwd.1} parent=19 // pred_check_branch
          %250 = sbr.rel (%p248) target = $region28
        $region27: #{fwd.1} parent=19 // pred_region
          %p251 = scmp.lt.s32.totalorder %s21, 1
          %s252 = scalar_select %p251, %s21, 1
          %s253 = smul.addr %s252, 8
          %s254 = scalar_lea.vmem %s2, %s253
        $region28: #{fwd.1} parent=19 // pred_fallthru
          _
        // Predicated region
        $region29: #{fwd.1} parent=19 // pred_check
          %p255 = pneg %p114
        $region30: #{fwd.1} parent=19 // pred_check_branch
          %257 = sbr.rel (%p255) target = $region32
        $region31: #{fwd.1} parent=19 // pred_region
          %s258 = sand.u32 %s104, 1
          %s259 = scalar_lea.sflag [#allocation4], %s258
          %s260 = sand.u32 %s104, 1
          %s261 = smul.addr %s260, 1024
          %s262 = scalar_lea.vmem [#allocation3], %s261
          %s264 = ssub.s32 16384, 16384
          %265 = vsyncadd %s259, %s264
          %s266 = smul.addr %s21, 128
          %s267 = smul.addr %s266, 128
          %s268 = scalar_lea.hbm %s3, %s267
          %s269 = sshll.u32 %s262, 4
          %s270 = int_to_ptr.vmem [resolvable:$true] %s269
          %275 = dma.hbm_to_vmem [thread:$0]  %s268, 16384, %s270, %s259, 512, 512, 32
        $region32: #{fwd.1} parent=19 // pred_fallthru
          _
        // Predicated region
        $region33: #{fwd.1} parent=19 // pred_check
          %p276 = pneg %p140
        $region34: #{fwd.1} parent=19 // pred_check_branch
          %278 = sbr.rel (%p276) target = $region36
        $region35: #{fwd.1} parent=19 // pred_region
          %p279 = scmp.lt.s32.totalorder %s21, 1
          %s280 = scalar_select %p279, %s21, 1
          %s281 = smul.addr %s280, 4
          %s282 = scalar_lea.vmem %s4, %s281
        $region36: #{fwd.1} parent=19 // pred_fallthru
          _
      $region20: #{fwd.1} parent=5 // pred_fallthru
        _
      %p283 = scmp.le.s32.totalorder 1, %s21
      %p284 = scmp.lt.s32.totalorder %s21, 3
      %p285 = pnand %p283, %p284
      %p286 = pneg %p285
      // Predicated region
      $region37: #{fwd.1} parent=5 // pred_check
        _
      $region38: #{fwd.1} parent=5 // pred_check_branch
        %288 = sbr.rel (%p285) target = $region40
      $region39: #{fwd.1} parent=5 // pred_region
        %s289 = ssub.s32 %s21, 1
        %s290 = sand.u32 %s107, 1
        %s291 = scalar_lea.sflag [#allocation4], %s290
        %s292 = sand.u32 %s107, 1
        %s293 = smul.addr %s292, 1024
        %s294 = scalar_lea.vmem [#allocation3], %s293
        // Predicated region
        $region41: #{fwd.1} parent=39 // pred_check
          %p295 = pneg %p120
        $region42: #{fwd.1} parent=39 // pred_check_branch
          %297 = sbr.rel (%p295) target = $region44
        $region43: #{fwd.1} parent=39 // pred_region
          %298 = dma.done %s291, 16384
        $region44: #{fwd.1} parent=39 // pred_fallthru
          _
        %p299 = pneg %p42
        %p300 = pneg %p39
        %p301 = scmp.lt.s32.totalorder %s26, 1
        %s302 = scalar_select %p301, %s26, 1
        %s303 = smul.addr %s302, 8
        %s304 = scalar_lea.vmem %s1, %s303
        %p305 = pneg %p68
        %p306 = pneg %p65
        %p307 = scmp.lt.s32.totalorder %s26, 1
        %s308 = scalar_select %p307, %s26, 1
        %s309 = smul.addr %s308, 8
        %s310 = scalar_lea.vmem %s2, %s309
        %p311 = pneg %p94
        %p312 = pneg %p91
        %s313 = sand.u32 %s107, 1
        %s314 = scalar_lea.sflag [#allocation4], %s313
        %s315 = sand.u32 %s107, 1
        %s316 = smul.addr %s315, 1024
        %s317 = scalar_lea.vmem [#allocation3], %s316
        %p318 = pneg %p120
        %p319 = pneg %p117
        %p320 = scmp.lt.s32.totalorder %s26, 1
        %s321 = scalar_select %p320, %s26, 1
        %s322 = smul.addr %s321, 4
        %s323 = scalar_lea.vmem %s4, %s322
        %p324 = pneg %p146
        %p325 = pneg %p143
        %p326 = pneg %p167
        %p327 = pneg %p164
        %p328 = pneg %p193
        %p329 = pneg %p190
        %s330 = sand.u32 %s26, 1
        %s331 = scalar_lea.sflag [#allocation8], %s330
        %s332 = sand.u32 %s180, 1
        %s333 = smul.addr %s332, 8
        %s334 = scalar_lea.vmem [#allocation7], %s333
        %p335 = pneg %p219
        %p336 = pneg %p216
        %s337 = sand.u32 %s26, 1
        %s338 = scalar_lea.sflag [#allocation8], %s337
        %s339 = sand.u32 %s206, 1
        %s340 = smul.addr %s339, 8
        %s341 = scalar_lea.vmem [#allocation9], %s340
        %p342 = scmp.lt.s32.totalorder %s26, 1
        %s343 = scalar_select %p342, %s26, 1
        %s344 = smul.addr %s343, 8
        %s345 = scalar_lea.vmem %s1, %s344
        %p346 = scmp.lt.s32.totalorder %s26, 1
        %s347 = scalar_select %p346, %s26, 1
        %s348 = smul.addr %s347, 8
        %s349 = scalar_lea.vmem %s2, %s348
        %p350 = scmp.lt.s32.totalorder %s26, 1
        %s351 = scalar_select %p350, %s26, 1
        %s352 = smul.addr %s351, 4
        %s353 = scalar_lea.vmem %s4, %s352
        %p354 = scmp.eq.s32.totalorder %s26, 0
        // Predicated region
        $region45: #{fwd.1} parent=39 // pred_check
          %p355 = pneg %p354
        $region46: #{fwd.1} parent=39 // pred_check_branch
          %357 = sbr.rel (%p355) target = $region48
        $region47: #{fwd.1} parent=39 // pred_region
          %v358 = vld [vmem:[%s0] sm:$0xff]
          %359 = vst [vmem:[#allocation2] sm:$0xff] %v358
        $region48: #{fwd.1} parent=39 // pred_fallthru
          _
        %v360 = vld [vmem:[%s345] sm:$0xff]
        %361 = vst [vmem:[#allocation2 + $0x8] sm:$0xff] %v360
        %v362 = vld [vmem:[#allocation2] sm:$0xff]
        %v363 = vld [vmem:[#allocation2 + $0x8] sm:$0xff]
        %v364 = vld [vmem:[%s294] sm:$0xff]
        %v365 = vld [vmem:[%s294 + $0x8] sm:$0xff]
        %v366 = vld [vmem:[%s294 + $0x10] sm:$0xff]
        %v367 = vld [vmem:[%s294 + $0x18] sm:$0xff]
        %v368 = vld [vmem:[%s294 + $0x20] sm:$0xff]
        %v369 = vld [vmem:[%s294 + $0x28] sm:$0xff]
        %v370 = vld [vmem:[%s294 + $0x30] sm:$0xff]
        %v371 = vld [vmem:[%s294 + $0x38] sm:$0xff]
        %v372 = vld [vmem:[%s294 + $0x40] sm:$0xff]
        %v373 = vld [vmem:[%s294 + $0x48] sm:$0xff]
        %v374 = vld [vmem:[%s294 + $0x50] sm:$0xff]
        %v375 = vld [vmem:[%s294 + $0x58] sm:$0xff]
        %v376 = vld [vmem:[%s294 + $0x60] sm:$0xff]
        %v377 = vld [vmem:[%s294 + $0x68] sm:$0xff]
        %v378 = vld [vmem:[%s294 + $0x70] sm:$0xff]
        %v379 = vld [vmem:[%s294 + $0x78] sm:$0xff]
        %v380 = vld [vmem:[%s294 + $0x80] sm:$0xff]
        %v381 = vld [vmem:[%s294 + $0x88] sm:$0xff]
        %v382 = vld [vmem:[%s294 + $0x90] sm:$0xff]
        %v383 = vld [vmem:[%s294 + $0x98] sm:$0xff]
        %v384 = vld [vmem:[%s294 + $0xa0] sm:$0xff]
        %v385 = vld [vmem:[%s294 + $0xa8] sm:$0xff]
        %v386 = vld [vmem:[%s294 + $0xb0] sm:$0xff]
        %v387 = vld [vmem:[%s294 + $0xb8] sm:$0xff]
        %v388 = vld [vmem:[%s294 + $0xc0] sm:$0xff]
        %v389 = vld [vmem:[%s294 + $0xc8] sm:$0xff]
        %v390 = vld [vmem:[%s294 + $0xd0] sm:$0xff]
        %v391 = vld [vmem:[%s294 + $0xd8] sm:$0xff]
        %v392 = vld [vmem:[%s294 + $0xe0] sm:$0xff]
        %v393 = vld [vmem:[%s294 + $0xe8] sm:$0xff]
        %v394 = vld [vmem:[%s294 + $0xf0] sm:$0xff]
        %v395 = vld [vmem:[%s294 + $0xf8] sm:$0xff]
        %v396 = vld [vmem:[%s294 + $0x100] sm:$0xff]
        %v397 = vld [vmem:[%s294 + $0x108] sm:$0xff]
        %v398 = vld [vmem:[%s294 + $0x110] sm:$0xff]
        %v399 = vld [vmem:[%s294 + $0x118] sm:$0xff]
        %v400 = vld [vmem:[%s294 + $0x120] sm:$0xff]
        %v401 = vld [vmem:[%s294 + $0x128] sm:$0xff]
        %v402 = vld [vmem:[%s294 + $0x130] sm:$0xff]
        %v403 = vld [vmem:[%s294 + $0x138] sm:$0xff]
        %v404 = vld [vmem:[%s294 + $0x140] sm:$0xff]
        %v405 = vld [vmem:[%s294 + $0x148] sm:$0xff]
        %v406 = vld [vmem:[%s294 + $0x150] sm:$0xff]
        %v407 = vld [vmem:[%s294 + $0x158] sm:$0xff]
        %v408 = vld [vmem:[%s294 + $0x160] sm:$0xff]
        %v409 = vld [vmem:[%s294 + $0x168] sm:$0xff]
        %v410 = vld [vmem:[%s294 + $0x170] sm:$0xff]
        %v411 = vld [vmem:[%s294 + $0x178] sm:$0xff]
        %v412 = vld [vmem:[%s294 + $0x180] sm:$0xff]
        %v413 = vld [vmem:[%s294 + $0x188] sm:$0xff]
        %v414 = vld [vmem:[%s294 + $0x190] sm:$0xff]
        %v415 = vld [vmem:[%s294 + $0x198] sm:$0xff]
        %v416 = vld [vmem:[%s294 + $0x1a0] sm:$0xff]
        %v417 = vld [vmem:[%s294 + $0x1a8] sm:$0xff]
        %v418 = vld [vmem:[%s294 + $0x1b0] sm:$0xff]
        %v419 = vld [vmem:[%s294 + $0x1b8] sm:$0xff]
        %v420 = vld [vmem:[%s294 + $0x1c0] sm:$0xff]
        %v421 = vld [vmem:[%s294 + $0x1c8] sm:$0xff]
        %v422 = vld [vmem:[%s294 + $0x1d0] sm:$0xff]
        %v423 = vld [vmem:[%s294 + $0x1d8] sm:$0xff]
        %v424 = vld [vmem:[%s294 + $0x1e0] sm:$0xff]
        %v425 = vld [vmem:[%s294 + $0x1e8] sm:$0xff]
        %v426 = vld [vmem:[%s294 + $0x1f0] sm:$0xff]
        %v427 = vld [vmem:[%s294 + $0x1f8] sm:$0xff]
        %v428 = vld [vmem:[%s294 + $0x200] sm:$0xff]
        %v429 = vld [vmem:[%s294 + $0x208] sm:$0xff]
        %v430 = vld [vmem:[%s294 + $0x210] sm:$0xff]
        %v431 = vld [vmem:[%s294 + $0x218] sm:$0xff]
        %v432 = vld [vmem:[%s294 + $0x220] sm:$0xff]
        %v433 = vld [vmem:[%s294 + $0x228] sm:$0xff]
        %v434 = vld [vmem:[%s294 + $0x230] sm:$0xff]
        %v435 = vld [vmem:[%s294 + $0x238] sm:$0xff]
        %v436 = vld [vmem:[%s294 + $0x240] sm:$0xff]
        %v437 = vld [vmem:[%s294 + $0x248] sm:$0xff]
        %v438 = vld [vmem:[%s294 + $0x250] sm:$0xff]
        %v439 = vld [vmem:[%s294 + $0x258] sm:$0xff]
        %v440 = vld [vmem:[%s294 + $0x260] sm:$0xff]
        %v441 = vld [vmem:[%s294 + $0x268] sm:$0xff]
        %v442 = vld [vmem:[%s294 + $0x270] sm:$0xff]
        %v443 = vld [vmem:[%s294 + $0x278] sm:$0xff]
        %v444 = vld [vmem:[%s294 + $0x280] sm:$0xff]
        %v445 = vld [vmem:[%s294 + $0x288] sm:$0xff]
        %v446 = vld [vmem:[%s294 + $0x290] sm:$0xff]
        %v447 = vld [vmem:[%s294 + $0x298] sm:$0xff]
        %v448 = vld [vmem:[%s294 + $0x2a0] sm:$0xff]
        %v449 = vld [vmem:[%s294 + $0x2a8] sm:$0xff]
        %v450 = vld [vmem:[%s294 + $0x2b0] sm:$0xff]
        %v451 = vld [vmem:[%s294 + $0x2b8] sm:$0xff]
        %v452 = vld [vmem:[%s294 + $0x2c0] sm:$0xff]
        %v453 = vld [vmem:[%s294 + $0x2c8] sm:$0xff]
        %v454 = vld [vmem:[%s294 + $0x2d0] sm:$0xff]
        %v455 = vld [vmem:[%s294 + $0x2d8] sm:$0xff]
        %v456 = vld [vmem:[%s294 + $0x2e0] sm:$0xff]
        %v457 = vld [vmem:[%s294 + $0x2e8] sm:$0xff]
        %v458 = vld [vmem:[%s294 + $0x2f0] sm:$0xff]
        %v459 = vld [vmem:[%s294 + $0x2f8] sm:$0xff]
        %v460 = vld [vmem:[%s294 + $0x300] sm:$0xff]
        %v461 = vld [vmem:[%s294 + $0x308] sm:$0xff]
        %v462 = vld [vmem:[%s294 + $0x310] sm:$0xff]
        %v463 = vld [vmem:[%s294 + $0x318] sm:$0xff]
        %v464 = vld [vmem:[%s294 + $0x320] sm:$0xff]
        %v465 = vld [vmem:[%s294 + $0x328] sm:$0xff]
        %v466 = vld [vmem:[%s294 + $0x330] sm:$0xff]
        %v467 = vld [vmem:[%s294 + $0x338] sm:$0xff]
        %v468 = vld [vmem:[%s294 + $0x340] sm:$0xff]
        %v469 = vld [vmem:[%s294 + $0x348] sm:$0xff]
        %v470 = vld [vmem:[%s294 + $0x350] sm:$0xff]
        %v471 = vld [vmem:[%s294 + $0x358] sm:$0xff]
        %v472 = vld [vmem:[%s294 + $0x360] sm:$0xff]
        %v473 = vld [vmem:[%s294 + $0x368] sm:$0xff]
        %v474 = vld [vmem:[%s294 + $0x370] sm:$0xff]
        %v475 = vld [vmem:[%s294 + $0x378] sm:$0xff]
        %v476 = vld [vmem:[%s294 + $0x380] sm:$0xff]
        %v477 = vld [vmem:[%s294 + $0x388] sm:$0xff]
        %v478 = vld [vmem:[%s294 + $0x390] sm:$0xff]
        %v479 = vld [vmem:[%s294 + $0x398] sm:$0xff]
        %v480 = vld [vmem:[%s294 + $0x3a0] sm:$0xff]
        %v481 = vld [vmem:[%s294 + $0x3a8] sm:$0xff]
        %v482 = vld [vmem:[%s294 + $0x3b0] sm:$0xff]
        %v483 = vld [vmem:[%s294 + $0x3b8] sm:$0xff]
        %v484 = vld [vmem:[%s294 + $0x3c0] sm:$0xff]
        %v485 = vld [vmem:[%s294 + $0x3c8] sm:$0xff]
        %v486 = vld [vmem:[%s294 + $0x3d0] sm:$0xff]
        %v487 = vld [vmem:[%s294 + $0x3d8] sm:$0xff]
        %v488 = vld [vmem:[%s294 + $0x3e0] sm:$0xff]
        %v489 = vld [vmem:[%s294 + $0x3e8] sm:$0xff]
        %v490 = vld [vmem:[%s294 + $0x3f0] sm:$0xff]
        %v491 = vld [vmem:[%s294 + $0x3f8] sm:$0xff]
        %v492 = vld [vmem:[%s353] sm:$0xf]
        %v494 = vlaneseq
        %v495 = vshrl.u32 %v494, 7
        %v496 = vsub.s32 0, %v495
        %v497 = vrot.slane %v492, %v496
        %v498 = vlaneseq
        %v499 = vshrl.u32 %v498, 7
        %v500 = vsub.s32 1, %v499
        %v501 = vrot.slane %v492, %v500
        %v502 = vlaneseq
        %v503 = vshrl.u32 %v502, 7
        %v504 = vsub.s32 2, %v503
        %v505 = vrot.slane %v492, %v504
        %v506 = vlaneseq
        %v507 = vshrl.u32 %v506, 7
        %v508 = vsub.s32 3, %v507
        %v509 = vrot.slane %v492, %v508
        %514 = vmatprep.subr.mxu0 %v365
        %515 = vmatpush1.msra.mxu0 %v364
        %516 = vmatprep.subr.mxu0 %v369
        %517 = vmatpush1.msra.mxu0 %v368
        %518 = vmatprep.subr.mxu0 %v373
        %519 = vmatpush1.msra.mxu0 %v372
        %520 = vmatprep.subr.mxu0 %v377
        %521 = vmatpush1.msra.mxu0 %v376
        %522 = vmatprep.subr.mxu0 %v381
        %523 = vmatpush1.msra.mxu0 %v380
        %524 = vmatprep.subr.mxu0 %v385
        %525 = vmatpush1.msra.mxu0 %v384
        %526 = vmatprep.subr.mxu0 %v389
        %527 = vmatpush1.msra.mxu0 %v388
        %528 = vmatprep.subr.mxu0 %v393
        %529 = vmatpush1.msra.mxu0 %v392
        %530 = vmatprep.subr.mxu0 %v397
        %531 = vmatpush1.msra.mxu0 %v396
        %532 = vmatprep.subr.mxu0 %v401
        %533 = vmatpush1.msra.mxu0 %v400
        %534 = vmatprep.subr.mxu0 %v405
        %535 = vmatpush1.msra.mxu0 %v404
        %536 = vmatprep.subr.mxu0 %v409
        %537 = vmatpush1.msra.mxu0 %v408
        %538 = vmatprep.subr.mxu0 %v413
        %539 = vmatpush1.msra.mxu0 %v412
        %540 = vmatprep.subr.mxu0 %v417
        %541 = vmatpush1.msra.mxu0 %v416
        %542 = vmatprep.subr.mxu0 %v421
        %543 = vmatpush1.msra.mxu0 %v420
        %544 = vmatprep.subr.mxu0 %v425
        %545 = vmatpush1.msra.mxu0 %v424
        %546 = vmatprep.subr.mxu0 %v429
        %547 = vmatpush1.msra.mxu0 %v428
        %548 = vmatprep.subr.mxu0 %v433
        %549 = vmatpush1.msra.mxu0 %v432
        %550 = vmatprep.subr.mxu0 %v437
        %551 = vmatpush1.msra.mxu0 %v436
        %552 = vmatprep.subr.mxu0 %v441
        %553 = vmatpush1.msra.mxu0 %v440
        %554 = vmatprep.subr.mxu0 %v445
        %555 = vmatpush1.msra.mxu0 %v444
        %556 = vmatprep.subr.mxu0 %v449
        %557 = vmatpush1.msra.mxu0 %v448
        %558 = vmatprep.subr.mxu0 %v453
        %559 = vmatpush1.msra.mxu0 %v452
        %560 = vmatprep.subr.mxu0 %v457
        %561 = vmatpush1.msra.mxu0 %v456
        %562 = vmatprep.subr.mxu0 %v461
        %563 = vmatpush1.msra.mxu0 %v460
        %564 = vmatprep.subr.mxu0 %v465
        %565 = vmatpush1.msra.mxu0 %v464
        %566 = vmatprep.subr.mxu0 %v469
        %567 = vmatpush1.msra.mxu0 %v468
        %568 = vmatprep.subr.mxu0 %v473
        %569 = vmatpush1.msra.mxu0 %v472
        %570 = vmatprep.subr.mxu0 %v477
        %571 = vmatpush1.msra.mxu0 %v476
        %572 = vmatprep.subr.mxu0 %v481
        %573 = vmatpush1.msra.mxu0 %v480
        %574 = vmatprep.subr.mxu0 %v485
        %575 = vmatpush1.msra.mxu0 %v484
        %576 = vmatprep.subr.mxu0 %v489
        %577 = vmatpush1.msra.mxu0 %v488
        %578 = vmatprep.mubr.f32.mxu0 %v363
        %579 = vmatmul.mubr.f32.gmra.mrb[0].mxu0 %v362
        %v580 = vpop.f32.mrb[0].mxu0
        %v581 = vadd.f32 %v497, %v580
        %v582 = vpop.f32.mrb[0].mxu0
        %v583 = vadd.f32 %v501, %v582
        %584 = vdwg.mxu0
        %585 = vmatprep.subr.mxu0 %v367
        %586 = vmatpush1.msra.mxu0 %v366
        %587 = vmatprep.subr.mxu0 %v371
        %588 = vmatpush1.msra.mxu0 %v370
        %589 = vmatprep.subr.mxu0 %v375
        %590 = vmatpush1.msra.mxu0 %v374
        %591 = vmatprep.subr.mxu0 %v379
        %592 = vmatpush1.msra.mxu0 %v378
        %593 = vmatprep.subr.mxu0 %v383
        %594 = vmatpush1.msra.mxu0 %v382
        %595 = vmatprep.subr.mxu0 %v387
        %596 = vmatpush1.msra.mxu0 %v386
        %597 = vmatprep.subr.mxu0 %v391
        %598 = vmatpush1.msra.mxu0 %v390
        %599 = vmatprep.subr.mxu0 %v395
        %600 = vmatpush1.msra.mxu0 %v394
        %601 = vmatprep.subr.mxu0 %v399
        %602 = vmatpush1.msra.mxu0 %v398
        %603 = vmatprep.subr.mxu0 %v403
        %604 = vmatpush1.msra.mxu0 %v402
        %605 = vmatprep.subr.mxu0 %v407
        %606 = vmatpush1.msra.mxu0 %v406
        %607 = vmatprep.subr.mxu0 %v411
        %608 = vmatpush1.msra.mxu0 %v410
        %609 = vmatprep.subr.mxu0 %v415
        %610 = vmatpush1.msra.mxu0 %v414
        %611 = vmatprep.subr.mxu0 %v419
        %612 = vmatpush1.msra.mxu0 %v418
        %613 = vmatprep.subr.mxu0 %v423
        %614 = vmatpush1.msra.mxu0 %v422
        %615 = vmatprep.subr.mxu0 %v427
        %616 = vmatpush1.msra.mxu0 %v426
        %617 = vmatprep.subr.mxu0 %v431
        %618 = vmatpush1.msra.mxu0 %v430
        %619 = vmatprep.subr.mxu0 %v435
        %620 = vmatpush1.msra.mxu0 %v434
        %621 = vmatprep.subr.mxu0 %v439
        %622 = vmatpush1.msra.mxu0 %v438
        %623 = vmatprep.subr.mxu0 %v443
        %624 = vmatpush1.msra.mxu0 %v442
        %625 = vmatprep.subr.mxu0 %v447
        %626 = vmatpush1.msra.mxu0 %v446
        %627 = vmatprep.subr.mxu0 %v451
        %628 = vmatpush1.msra.mxu0 %v450
        %629 = vmatprep.subr.mxu0 %v455
        %630 = vmatpush1.msra.mxu0 %v454
        %631 = vmatprep.subr.mxu0 %v459
        %632 = vmatpush1.msra.mxu0 %v458
        %633 = vmatprep.subr.mxu0 %v463
        %634 = vmatpush1.msra.mxu0 %v462
        %635 = vmatprep.subr.mxu0 %v467
        %636 = vmatpush1.msra.mxu0 %v466
        %637 = vmatprep.subr.mxu0 %v471
        %638 = vmatpush1.msra.mxu0 %v470
        %639 = vmatprep.subr.mxu0 %v475
        %640 = vmatpush1.msra.mxu0 %v474
        %641 = vmatprep.subr.mxu0 %v479
        %642 = vmatpush1.msra.mxu0 %v478
        %643 = vmatprep.subr.mxu0 %v483
        %644 = vmatpush1.msra.mxu0 %v482
        %645 = vmatprep.subr.mxu0 %v487
        %646 = vmatpush1.msra.mxu0 %v486
        %647 = vmatprep.subr.mxu0 %v491
        %648 = vmatpush1.msra.mxu0 %v490
        %649 = vmatprep.mubr.f32.mxu0 %v363
        %650 = vmatmul.mubr.f32.gmra.mrb[0].mxu0 %v362
        %v651 = vpop.f32.mrb[0].mxu0
        %v652 = vadd.f32 %v505, %v651
        %v653 = vpop.f32.mrb[0].mxu0
        %v654 = vadd.f32 %v509, %v653
        %655 = vdwg.mxu0
        %v656 = vxor.u32 %v581, 2147483648
        %v657 = vmul.f32 %v656, 1.442695
        %v658 = vpow.pop %v657
        %v659 = vadd.f32 %v658, 1.0
        %v660 = vrcp.pop %v659
        %v661 = vmul.f32 1.0, %v660
        %v662 = vxor.u32 %v583, 2147483648
        %v663 = vmul.f32 %v662, 1.442695
        %v664 = vpow.pop %v663
        %v665 = vadd.f32 %v664, 1.0
        %v666 = vrcp.pop %v665
        %v667 = vmul.f32 1.0, %v666
        %v668 = vtanh.pop %v652
        %v669 = vxor.u32 %v654, 2147483648
        %v670 = vmul.f32 %v669, 1.442695
        %v671 = vpow.pop %v670
        %v672 = vadd.f32 %v671, 1.0
        %v673 = vrcp.pop %v672
        %v674 = vmul.f32 1.0, %v673
        %v675 = vld [vmem:[%s349] sm:$0xff]
        %v676 = vmul.f32 %v667, %v675
        %v677 = vmul.f32 %v661, %v668
        %v678 = vadd.f32 %v676, %v677
        %v679 = vtanh.pop %v678
        %v680 = vmul.f32 %v674, %v679
        %681 = vst [vmem:[%s334] sm:$0xff] %v680
        %682 = vst [vmem:[%s341] sm:$0xff] %v678
        %683 = vst [vmem:[#allocation6] sm:$0xff] %v680
        %684 = vst [vmem:[#allocation2] sm:$0xff] %v680
        %s685 = sand.u32 %s26, 1
        %s686 = scalar_lea.sflag [#allocation8], %s685
        %s687 = sand.u32 %s180, 1
        %s688 = smul.addr %s687, 8
        %s689 = scalar_lea.vmem [#allocation7], %s688
        %s690 = sand.u32 %s26, 1
        %s691 = scalar_lea.sflag [#allocation8], %s690
        %s692 = sand.u32 %s206, 1
        %s693 = smul.addr %s692, 8
        %s694 = scalar_lea.vmem [#allocation9], %s693
        // Predicated region
        $region49: #{fwd.1} parent=39 // pred_check
          %p695 = pneg %p164
        $region50: #{fwd.1} parent=39 // pred_check_branch
          %697 = sbr.rel (%p695) target = $region52
        $region51: #{fwd.1} parent=39 // pred_region
          %s699 = ssub.s32 128, 128
          %700 = vsyncadd [#allocation5], %s699
          %s702 = sshll.u32 [#allocation6], 4
          %s703 = int_to_ptr.vmem [resolvable:$true] %s702
          %705 = dma.vmem_to_hbm [thread:$0]  %s703, 128, %s5, [#allocation5]
        $region52: #{fwd.1} parent=39 // pred_fallthru
          _
        // Predicated region
        $region53: #{fwd.1} parent=39 // pred_check
          %p706 = pneg %p190
        $region54: #{fwd.1} parent=39 // pred_check_branch
          %708 = sbr.rel (%p706) target = $region56
        $region55: #{fwd.1} parent=39 // pred_region
          %s710 = ssub.s32 128, 128
          %711 = vsyncadd %s686, %s710
          %s712 = smul.addr %s26, 128
          %s713 = scalar_lea.hbm %s6, %s712
          %s715 = sshll.u32 %s689, 4
          %s716 = int_to_ptr.vmem [resolvable:$true] %s715
          %718 = dma.vmem_to_hbm [thread:$0]  %s716, 128, %s713, %s686
        $region56: #{fwd.1} parent=39 // pred_fallthru
          _
        // Predicated region
        $region57: #{fwd.1} parent=39 // pred_check
          %p719 = pneg %p216
        $region58: #{fwd.1} parent=39 // pred_check_branch
          %721 = sbr.rel (%p719) target = $region60
        $region59: #{fwd.1} parent=39 // pred_region
          %s723 = ssub.s32 128, 128
          %724 = vsyncadd %s691, %s723
          %s725 = smul.addr %s26, 128
          %s726 = scalar_lea.hbm %s7, %s725
          %s728 = sshll.u32 %s694, 4
          %s729 = int_to_ptr.vmem [resolvable:$true] %s728
          %731 = dma.vmem_to_hbm [thread:$0]  %s729, 128, %s726, %s691
        $region60: #{fwd.1} parent=39 // pred_fallthru
          _
        // Predicated region
        $region61: #{fwd.1} parent=39 // pred_check
          %p732 = pneg %p164
        $region62: #{fwd.1} parent=39 // pred_check_branch
          %734 = sbr.rel (%p732) target = $region64
        $region63: #{fwd.1} parent=39 // pred_region
          %735 = dma.done [#allocation5], 128
        $region64: #{fwd.1} parent=39 // pred_fallthru
          _
      $region40: #{fwd.1} parent=5 // pred_fallthru
        _
      %p736 = scmp.le.s32.totalorder 2, %s21
      // Predicated region
      $region65: #{fwd.1} parent=5 // pred_check
        %p737 = pneg %p736
      $region66: #{fwd.1} parent=5 // pred_check_branch
        %739 = sbr.rel (%p737) target = $region68
      $region67: #{fwd.1} parent=5 // pred_region
        %s740 = ssub.s32 %s21, 2
        // Predicated region
        $region69: #{fwd.1} parent=67 // pred_check
          %p741 = pneg %p196
        $region70: #{fwd.1} parent=67 // pred_check_branch
          %743 = sbr.rel (%p741) target = $region72
        $region71: #{fwd.1} parent=67 // pred_region
          %s744 = sand.u32 %s27, 1
          %s745 = scalar_lea.sflag [#allocation8], %s744
          %s746 = sand.u32 %s181, 1
          %s747 = smul.addr %s746, 8
          %s748 = scalar_lea.vmem [#allocation7], %s747
          %749 = dma.done %s745, 128
        $region72: #{fwd.1} parent=67 // pred_fallthru
          _
        // Predicated region
        $region73: #{fwd.1} parent=67 // pred_check
          %p750 = pneg %p222
        $region74: #{fwd.1} parent=67 // pred_check_branch
          %752 = sbr.rel (%p750) target = $region76
        $region75: #{fwd.1} parent=67 // pred_region
          %s753 = sand.u32 %s27, 1
          %s754 = scalar_lea.sflag [#allocation8], %s753
          %s755 = sand.u32 %s207, 1
          %s756 = smul.addr %s755, 8
          %s757 = scalar_lea.vmem [#allocation9], %s756
          %758 = dma.done %s754, 128
        $region76: #{fwd.1} parent=67 // pred_fallthru
          _
      $region68: #{fwd.1} parent=5 // pred_fallthru
        _
    $region6: #{fwd.1} parent=1 // loop_footer
      %s25 = sadd.s32 1, %s21
    $region7: #{fwd.1} parent=1 // loop_footer_branch
      %20 = sbr.rel target = $region3
    $region8: #{fwd.1} parent=1 // loop_exit
      _
    %759 = vsyncpa [#allocation4], 1
    %s760 = scalar_lea.sflag [#allocation4], 1
    %761 = vsyncpa %s760, 1
    %762 = vsyncpa [#allocation5], 1
    %s763 = scalar_lea.sflag [#allocation5], 1
    %764 = vsyncpa %s763, 1
    %765 = vsyncpa [#allocation8], 1
    %s766 = scalar_lea.sflag [#allocation8], 1
    %767 = vsyncpa %s766, 1

</llo_original>
